<compile_context>
chip_gen: v7x
topology: tpu7x:2x2x1
jax: 0.10.0
libtpu: 0.0.40
codegen_flags: <defaults>
</compile_context>

<pallas_src>
import functools

import jax
import jax.numpy as jnp
from jax import lax
from jax.experimental import pallas as pl
from jax.experimental.pallas import tpu as pltpu

NUM_CLASSES = 8          # cfg num_classes
NEGPOS_RATIO = 3         # cfg.TRAIN.NEG_RATIO
OVERLAP_THRESHOLD = 0.5  # cfg.TRAIN.OVERLAP
VARIANCES = (0.1, 0.2)   # size_cfg.VARIANCE


# ----------------------------- Pallas kernel ------------------------------- #
def _refine_multibox_loss_kernel(num_neg_ref,   # scalar prefetch: (B,) i32 SMEM
                                 conf_ref,      # (BB, C, P) f32
                                 loc_ref,       # (BB, 4, P) f32
                                 conf_t_ref,    # (BB, 1, P) i32
                                 loc_t_ref,     # (BB, 4, P) f32
                                 out_ref):      # (1, 1, 2P) f32 fused output
    BB, C, P = conf_ref.shape
    base = pl.program_id(0) * BB

    # ---- loop-invariant machinery (built once per grid step) --------------- #
    cls_iota = lax.broadcasted_iota(jnp.int32, (C, P), 0)            # (C,P)
    j_idx = lax.broadcasted_iota(jnp.int32, (P, P), 0)
    i_idx = lax.broadcasted_iota(jnp.int32, (P, P), 1)
    tri = j_idx < i_idx                                              # (P,P) bool
    ones_row = jnp.ones((1, P), jnp.bfloat16)                        # MXU LHS (bf16)

    def body(b, carry):
        acc_l, acc_c = carry
        conf_b = conf_ref[b]          # (C, P) f32
        loc_b = loc_ref[b]            # (4, P) f32
        ct_b = conf_t_ref[b]          # (1, P) i32
        loc_t_b = loc_t_ref[b]        # (4, P) f32

        # --- per-prior cross-entropy: ce = log_sum_exp(conf) - conf[target] - #
        m = jnp.max(conf_b, axis=0, keepdims=True)                           # (1,P)
        lse = jnp.log(jnp.sum(jnp.exp(conf_b - m), axis=0, keepdims=True)) + m
        gathered = jnp.sum(jnp.where(cls_iota == ct_b, conf_b, 0.0),
                           axis=0, keepdims=True)                            # (1,P)
        ce = lse - gathered                                                   # (1,P)

        pos_b = ct_b > 0                                                      # (1,P)
        posf = pos_b.astype(jnp.float32)
        # OHEM mining loss: positives zeroed (f32 compares kept for exact ties)
        mine = jnp.where(pos_b, 0.0, ce)                                      # (1,P)

        # --- localization smooth-L1 (summed over the 4 coords) -------------- #
        diff = loc_b - loc_t_b
        ad = jnp.abs(diff)
        sl1 = jnp.where(ad < 1.0, 0.5 * diff * diff, ad - 0.5)                # (4,P)
        sl1_sum = jnp.sum(sl1, axis=0, keepdims=True)                         # (1,P)

        # --- OHEM rank: count of priors sorting before each prior ----------- #
        mine_col = jnp.transpose(mine, (1, 0))                                # (P,1)
        # before[j,i] = 1 iff prior j sorts before prior i in descending
        # mining-loss order (stable tie-break by index); implicit broadcast.
        before = (mine_col > mine) | ((mine_col == mine) & tri)              # (P,P)
        # rank[i] = sum_j before[j,i]  -> column sum on the MXU, bf16 operands
        # (0/1 exact), f32 accumulation keeps integer counts <= P exact.
        rank = jnp.dot(ones_row, before.astype(jnp.bfloat16),
                       preferred_element_type=jnp.float32)                   # (1,P)

        nneg = num_neg_ref[base + b].astype(jnp.float32)                      # scalar
        sel = pos_b | (rank < nneg)                                           # (1,P)

        acc_c = acc_c + jnp.where(sel, ce, 0.0)
        acc_l = acc_l + sl1_sum * posf
        return acc_l, acc_c

    acc0 = (jnp.zeros((1, P), jnp.float32), jnp.zeros((1, P), jnp.float32))
    acc_l, acc_c = lax.fori_loop(0, BB, body, acc0)

    # fused lane-dense output slab: loss_l in lanes [0,P), loss_c in [P,2P)
    out_ref[:, :, 0:P] = acc_l[None]
    out_ref[:, :, P:2 * P] = acc_c[None]


# --------------------------- plain-JAX glue (match) ------------------------ #
def _point_form(priors):  # (cx,cy,w,h) -> (xmin,ymin,xmax,ymax)
    return jnp.concatenate([priors[:, :2] - priors[:, 2:] / 2.0,
                            priors[:, :2] + priors[:, 2:] / 2.0], axis=1)


def _jaccard(box_a, box_b):  # corner form, (T,4) x (P,4) -> (T,P)
    max_xy = jnp.minimum(box_a[:, None, 2:], box_b[None, :, 2:])
    min_xy = jnp.maximum(box_a[:, None, :2], box_b[None, :, :2])
    wh = jnp.maximum(max_xy - min_xy, 0.0)
    inter = wh[..., 0] * wh[..., 1]
    area_a = ((box_a[:, 2] - box_a[:, 0]) * (box_a[:, 3] - box_a[:, 1]))[:, None]
    area_b = ((box_b[:, 2] - box_b[:, 0]) * (box_b[:, 3] - box_b[:, 1]))[None, :]
    return inter / (area_a + area_b - inter)


def _encode(matched, priors, variances):
    g_cxcy = (matched[:, :2] + matched[:, 2:]) / 2.0 - priors[:, :2]
    g_cxcy = g_cxcy / (variances[0] * priors[:, 2:])
    g_wh = (matched[:, 2:] - matched[:, :2]) / priors[:, 2:]
    g_wh = jnp.log(g_wh) / variances[1]
    return jnp.concatenate([g_cxcy, g_wh], axis=1)


def _match(threshold, truths, priors, variances, labels):
    T = truths.shape[0]
    overlaps = _jaccard(truths, _point_form(priors))               # (T, P)
    best_prior_idx = jnp.argmax(overlaps, axis=1)                  # (T,)
    best_truth_overlap = jnp.max(overlaps, axis=0)                 # (P,)
    best_truth_idx = jnp.argmax(overlaps, axis=0)                  # (P,)

    # Ensure every GT keeps its best prior; sequential loop matches the
    # PyTorch "last j wins" semantics when two GTs share the same best prior.
    def body(j, carry):
        bto, bti = carry
        p = best_prior_idx[j]
        bto = bto.at[p].set(2.0)
        bti = bti.at[p].set(j)
        return bto, bti

    best_truth_overlap, best_truth_idx = lax.fori_loop(
        0, T, body, (best_truth_overlap, best_truth_idx))

    matches = truths[best_truth_idx]                               # (P, 4)
    conf = labels[best_truth_idx].astype(jnp.int32)                # labels are 1-based
    conf = jnp.where(best_truth_overlap < threshold, 0, conf)
    loc = _encode(matches, priors, variances)                      # (P, 4)
    return loc, conf


# ------------------------------- wrapper ----------------------------------- #
def _pick_batch_block(batch):
    """Images per grid step.  v5e/v6e: whole (capped) batch in one step;
    v7x: make sure there are >= 2 'parallel' steps for the two TensorCores."""
    bb = min(batch, 8)                 # cap so input DMA pipelines under compute
    while batch % bb:
        bb -= 1
    try:
        kind = jax.devices()[0].device_kind.lower()
    except Exception:
        kind = ""
    if "v7" in kind and batch % 2 == 0 and batch // bb < 2:
        bb = max(batch // 2, 1)
    return bb


@functools.partial(jax.jit, static_argnames=("batch_block",))
def refine_multibox_loss(loc_data, conf_data, priors, target_boxes, target_labels,
                         batch_block=None):
    """use_arm=False / OHEM=True path of RefineMultiBoxLoss.forward."""
    # TODO(synk): refine_match / use_arm / filter_object (ARM-refined anchors,
    #             objectness filtering) path not implemented.
    B, P, C = conf_data.shape
    priors = priors[:P]

    loc_t, conf_t = jax.vmap(
        lambda t, l: _match(OVERLAP_THRESHOLD, t, priors, VARIANCES, l)
    )(target_boxes, target_labels)                                 # (B,P,4), (B,P)

    pos = conf_t > 0
    num_pos = jnp.sum(pos.astype(jnp.int32), axis=1)               # (B,)
    total_pos = jnp.sum(num_pos)
    num_neg_real = jnp.minimum(NEGPOS_RATIO * num_pos, P - 1)
    num_neg_fake = min(NEGPOS_RATIO * 15, P - 1)                   # fake_num_pos = 15
    num_neg = jnp.where(total_pos > 0, num_neg_real, num_neg_fake).astype(jnp.int32)

    # kernel layout: priors on the lane axis
    # TODO(synk): at real SSD prior counts, emit this layout from the network
    #             (the transpose is a full extra HBM round trip of conf_data).
    conf_k = jnp.transpose(conf_data, (0, 2, 1)).astype(jnp.float32)   # (B,C,P)
    loc_k = jnp.transpose(loc_data, (0, 2, 1)).astype(jnp.float32)     # (B,4,P)
    loc_t_k = jnp.transpose(loc_t, (0, 2, 1)).astype(jnp.float32)      # (B,4,P)
    conf_t_k = conf_t[:, None, :].astype(jnp.int32)                    # (B,1,P)

    if batch_block is None:
        BB = _pick_batch_block(B)
    else:
        BB = int(batch_block)
        if BB < 1 or B % BB != 0:
            BB = B
    G = B // BB

    slab = pl.pallas_call(
        _refine_multibox_loss_kernel,
        out_shape=jax.ShapeDtypeStruct((G, 1, 2 * P), jnp.float32),
        grid_spec=pltpu.PrefetchScalarGridSpec(
            num_scalar_prefetch=1,
            grid=(G,),
            in_specs=[
                pl.BlockSpec((BB, C, P), lambda g, nn: (g, 0, 0)),
                pl.BlockSpec((BB, 4, P), lambda g, nn: (g, 0, 0)),
                pl.BlockSpec((BB, 1, P), lambda g, nn: (g, 0, 0)),
                pl.BlockSpec((BB, 4, P), lambda g, nn: (g, 0, 0)),
            ],
            out_specs=pl.BlockSpec((1, 1, 2 * P), lambda g, nn: (g, 0, 0)),
        ),
        compiler_params=pltpu.CompilerParams(
            dimension_semantics=("parallel",)),
    )(num_neg, conf_k, loc_k, conf_t_k, loc_t_k)                   # (G, 1, 2P)

    loss_l_sum = jnp.sum(slab[:, :, :P])
    loss_c_sum = jnp.sum(slab[:, :, P:])

    N = jnp.where(total_pos > 0, total_pos.astype(jnp.float32), 1.0)
    loss_l = jnp.where(total_pos > 0, loss_l_sum / N, 0.0)
    loss_c = loss_c_sum / N
    return loss_l, loss_c


# --------------------------------- main ------------------------------------ #
if __name__ == "__main__":
    key = jax.random.PRNGKey(0)
    B, P, C, T = 2, 128, NUM_CLASSES, 3
    k1, k2, k3, k4, k5 = jax.random.split(key, 5)

    # network predictions (loc_data, conf_data) and prior boxes
    loc_data = 0.1 * jax.random.normal(k1, (B, P, 4), jnp.float32)
    conf_data = jax.random.normal(k2, (B, P, C), jnp.float32)

    # priors: 16x8 grid of 0.2x0.2 default boxes (center form, cx,cy,w,h)
    gx = (jnp.arange(16, dtype=jnp.float32) + 0.5) / 16.0
    gy = (jnp.arange(8, dtype=jnp.float32) + 0.5) / 8.0
    cx, cy = jnp.meshgrid(gx, gy)
    priors = jnp.stack(
        [cx.reshape(-1), cy.reshape(-1),
         jnp.full((P,), 0.2, jnp.float32), jnp.full((P,), 0.2, jnp.float32)],
        axis=1)

    # synthetic ground truth: corner-form boxes in [0,1], labels in [1, C-1]
    centers = jax.random.uniform(k3, (B, T, 2), minval=0.25, maxval=0.75)
    sizes = jax.random.uniform(k4, (B, T, 2), minval=0.10, maxval=0.35)
    target_boxes = jnp.concatenate([centers - sizes / 2.0, centers + sizes / 2.0],
                                   axis=-1)
    target_labels = jax.random.randint(k5, (B, T), 1, C)

    loss_l, loss_c = refine_multibox_loss(loc_data, conf_data, priors,
                                          target_boxes, target_labels)
    jax.block_until_ready((loss_l, loss_c))
    print("KERNEL_OK")
</pallas_src>

<mosaic_0001>
module attributes {stable_mosaic.version = 11 : i64} {
  func.func @_refine_multibox_loss_kernel(%arg0: i32, %arg1: memref<2xi32, #tpu.memory_space<smem>>, %arg2: memref<2x8x128xf32, #tpu.memory_space<vmem>>, %arg3: memref<2x4x128xf32, #tpu.memory_space<vmem>>, %arg4: memref<2x1x128xi32, #tpu.memory_space<vmem>>, %arg5: memref<2x4x128xf32, #tpu.memory_space<vmem>>, %arg6: memref<1x1x256xf32, #tpu.memory_space<vmem>>) attributes {dimension_semantics = [#tpu.dimension_semantics<parallel>], iteration_bounds = array<i64: 1>, scalar_prefetch = 1 : i64, scratch_operands = 0 : i64, tpu.core_type = #tpu.core_type<tc>, window_params = [{transform_indices = @transform_0, window_bounds = array<i64: 2, 8, 128>}, {transform_indices = @transform_1, window_bounds = array<i64: 2, 4, 128>}, {transform_indices = @transform_2, window_bounds = array<i64: 2, 1, 128>}, {transform_indices = @transform_3, window_bounds = array<i64: 2, 4, 128>}, {transform_indices = @transform_4, window_bounds = array<i64: 1, 1, 256>}]} {
    %c2_i32 = arith.constant 2 : i32
    %0 = arith.muli %arg0, %c2_i32 : i32
    %1 = tpu.iota {dimensions = array<i32: 0>} : vector<8x128xi32>
    %2 = tpu.iota {dimensions = array<i32: 0>} : vector<128x128xi32>
    %3 = tpu.iota {dimensions = array<i32: 1>} : vector<128x128xi32>
    %4 = arith.cmpi slt, %2, %3 : vector<128x128xi32>
    %cst = arith.constant 1.000000e+00 : bf16
    %5 = vector.broadcast %cst : bf16 to vector<1x128xbf16>
    %cst_0 = arith.constant 0.000000e+00 : f32
    %6 = vector.broadcast %cst_0 : f32 to vector<1x128xf32>
    %cst_1 = arith.constant 0.000000e+00 : f32
    %7 = vector.broadcast %cst_1 : f32 to vector<1x128xf32>
    %c0_i32 = arith.constant 0 : i32
    %c2_i32_2 = arith.constant 2 : i32
    %8 = arith.addi %c0_i32, %c2_i32_2 : i32
    %c1_i32 = arith.constant 1 : i32
    %9:2 = scf.for %arg7 = %c0_i32 to %8 step %c1_i32 iter_args(%arg8 = %6, %arg9 = %7) -> (vector<1x128xf32>, vector<1x128xf32>)  : i32 {
      %14 = arith.index_cast %arg7 : i32 to index
      %c0_8 = arith.constant 0 : index
      %c0_9 = arith.constant 0 : index
      %15 = vector.load %arg2[%14, %c0_8, %c0_9] : memref<2x8x128xf32, #tpu.memory_space<vmem>>, vector<1x8x128xf32>
      %16 = vector.shape_cast %15 : vector<1x8x128xf32> to vector<8x128xf32>
      %17 = arith.index_cast %arg7 : i32 to index
      %c0_10 = arith.constant 0 : index
      %c0_11 = arith.constant 0 : index
      %18 = vector.load %arg3[%17, %c0_10, %c0_11] : memref<2x4x128xf32, #tpu.memory_space<vmem>>, vector<1x4x128xf32>
      %19 = vector.shape_cast %18 : vector<1x4x128xf32> to vector<4x128xf32>
      %20 = arith.index_cast %arg7 : i32 to index
      %c0_12 = arith.constant 0 : index
      %c0_13 = arith.constant 0 : index
      %21 = vector.load %arg4[%20, %c0_12, %c0_13] : memref<2x1x128xi32, #tpu.memory_space<vmem>>, vector<1x1x128xi32>
      %22 = vector.shape_cast %21 : vector<1x1x128xi32> to vector<1x128xi32>
      %23 = arith.index_cast %arg7 : i32 to index
      %c0_14 = arith.constant 0 : index
      %c0_15 = arith.constant 0 : index
      %24 = vector.load %arg5[%23, %c0_14, %c0_15] : memref<2x4x128xf32, #tpu.memory_space<vmem>>, vector<1x4x128xf32>
      %25 = vector.shape_cast %24 : vector<1x4x128xf32> to vector<4x128xf32>
      %cst_16 = arith.constant dense<0xFF800000> : vector<128xf32>
      %26 = vector.multi_reduction <maximumf>, %16, %cst_16 [0] : vector<8x128xf32> to vector<128xf32>
      %27 = vector.shape_cast %26 : vector<128xf32> to vector<1x128xf32>
      %28 = vector.broadcast %27 : vector<1x128xf32> to vector<8x128xf32>
      %29 = arith.subf %16, %28 : vector<8x128xf32>
      %30 = math.exp %29 : vector<8x128xf32>
      %cst_17 = arith.constant dense<0.000000e+00> : vector<128xf32>
      %31 = vector.multi_reduction <add>, %30, %cst_17 [0] : vector<8x128xf32> to vector<128xf32>
      %32 = vector.shape_cast %31 : vector<128xf32> to vector<1x128xf32>
      %33 = math.log %32 : vector<1x128xf32>
      %34 = arith.addf %33, %27 : vector<1x128xf32>
      %35 = vector.broadcast %22 : vector<1x128xi32> to vector<8x128xi32>
      %36 = arith.cmpi eq, %1, %35 : vector<8x128xi32>
      %cst_18 = arith.constant 0.000000e+00 : f32
      %37 = vector.broadcast %cst_18 : f32 to vector<8x128xf32>
      %38 = arith.select %36, %16, %37 : vector<8x128xi1>, vector<8x128xf32>
      %cst_19 = arith.constant dense<0.000000e+00> : vector<128xf32>
      %39 = vector.multi_reduction <add>, %38, %cst_19 [0] : vector<8x128xf32> to vector<128xf32>
      %40 = vector.shape_cast %39 : vector<128xf32> to vector<1x128xf32>
      %41 = arith.subf %34, %40 : vector<1x128xf32>
      %c0_i32_20 = arith.constant 0 : i32
      %42 = vector.broadcast %c0_i32_20 : i32 to vector<1x128xi32>
      %43 = arith.cmpi sgt, %22, %42 : vector<1x128xi32>
      %44 = arith.extui %43 : vector<1x128xi1> to vector<1x128xi32>
      %45 = arith.sitofp %44 : vector<1x128xi32> to vector<1x128xf32>
      %cst_21 = arith.constant 0.000000e+00 : f32
      %46 = vector.broadcast %cst_21 : f32 to vector<1x128xf32>
      %47 = arith.select %43, %46, %41 : vector<1x128xi1>, vector<1x128xf32>
      %48 = arith.subf %19, %25 : vector<4x128xf32>
      %49 = math.absf %48 : vector<4x128xf32>
      %cst_22 = arith.constant 1.000000e+00 : f32
      %50 = vector.broadcast %cst_22 : f32 to vector<4x128xf32>
      %51 = arith.cmpf olt, %49, %50 : vector<4x128xf32>
      %cst_23 = arith.constant 5.000000e-01 : f32
      %52 = vector.broadcast %cst_23 : f32 to vector<4x128xf32>
      %53 = arith.mulf %52, %48 : vector<4x128xf32>
      %54 = arith.mulf %53, %48 : vector<4x128xf32>
      %cst_24 = arith.constant 5.000000e-01 : f32
      %55 = vector.broadcast %cst_24 : f32 to vector<4x128xf32>
      %56 = arith.subf %49, %55 : vector<4x128xf32>
      %57 = arith.select %51, %54, %56 : vector<4x128xi1>, vector<4x128xf32>
      %cst_25 = arith.constant dense<0.000000e+00> : vector<128xf32>
      %58 = vector.multi_reduction <add>, %57, %cst_25 [0] : vector<4x128xf32> to vector<128xf32>
      %59 = vector.shape_cast %58 : vector<128xf32> to vector<1x128xf32>
      %60 = tpu.transpose %47, [1, 0] : vector<1x128xf32> -> vector<128x1xf32>
      %61 = vector.broadcast %60 : vector<128x1xf32> to vector<128x128xf32>
      %62 = vector.broadcast %47 : vector<1x128xf32> to vector<128x128xf32>
      %63 = arith.cmpf ogt, %61, %62 : vector<128x128xf32>
      %64 = vector.broadcast %60 : vector<128x1xf32> to vector<128x128xf32>
      %65 = vector.broadcast %47 : vector<1x128xf32> to vector<128x128xf32>
      %66 = arith.cmpf oeq, %64, %65 : vector<128x128xf32>
      %67 = arith.andi %66, %4 : vector<128x128xi1>
      %68 = arith.ori %63, %67 : vector<128x128xi1>
      %69 = arith.extui %68 : vector<128x128xi1> to vector<128x128xi32>
      %70 = arith.sitofp %69 : vector<128x128xi32> to vector<128x128xf32>
      %71 = arith.truncf %70 : vector<128x128xf32> to vector<128x128xbf16>
      %cst_26 = arith.constant dense<0.000000e+00> : vector<1x128xf32>
      %72 = tpu.matmul %5, %71, %cst_26 {dimension_numbers = #tpu.dot_dimension_numbers<[1], [0], [0], [1], [0, 0, 1, 1], [], []>} : vector<1x128xbf16>, vector<128x128xbf16>, vector<1x128xf32> -> vector<1x128xf32>
      %73 = arith.addi %0, %arg7 : i32
      %74 = arith.index_cast %73 : i32 to index
      %75 = memref.load %arg1[%74] : memref<2xi32, #tpu.memory_space<smem>>
      %76 = arith.sitofp %75 : i32 to f32
      %77 = vector.broadcast %76 : f32 to vector<1x128xf32>
      %78 = arith.cmpf olt, %72, %77 : vector<1x128xf32>
      %79 = arith.ori %43, %78 : vector<1x128xi1>
      %cst_27 = arith.constant 0.000000e+00 : f32
      %80 = vector.broadcast %cst_27 : f32 to vector<1x128xf32>
      %81 = arith.select %79, %41, %80 : vector<1x128xi1>, vector<1x128xf32>
      %82 = arith.addf %arg9, %81 : vector<1x128xf32>
      %83 = arith.mulf %59, %45 : vector<1x128xf32>
      %84 = arith.addf %arg8, %83 : vector<1x128xf32>
      scf.yield %84, %82 : vector<1x128xf32>, vector<1x128xf32>
    }
    %c2_i32_3 = arith.constant 2 : i32
    %10 = vector.shape_cast %9#0 : vector<1x128xf32> to vector<1x1x128xf32>
    %c0 = arith.constant 0 : index
    %c0_4 = arith.constant 0 : index
    %c0_5 = arith.constant 0 : index
    %11 = vector.load %arg6[%c0, %c0_4, %c0_5] : memref<1x1x256xf32, #tpu.memory_space<vmem>>, vector<1x1x128xf32>
    tpu.vector_store %arg6[%c0, %c0_4, %c0_5], %10 {strides = array<i32>} : memref<1x1x256xf32, #tpu.memory_space<vmem>>, vector<1x1x128xf32>,
    %12 = vector.shape_cast %9#1 : vector<1x128xf32> to vector<1x1x128xf32>
    %c0_6 = arith.constant 0 : index
    %c0_7 = arith.constant 0 : index
    %c128 = arith.constant 128 : index
    %13 = vector.load %arg6[%c0_6, %c0_7, %c128] : memref<1x1x256xf32, #tpu.memory_space<vmem>>, vector<1x1x128xf32>
    tpu.vector_store %arg6[%c0_6, %c0_7, %c128], %12 {strides = array<i32>} : memref<1x1x256xf32, #tpu.memory_space<vmem>>, vector<1x1x128xf32>,
    return
  }
  func.func @transform_0(%arg0: i32, %arg1: memref<2xi32, #tpu.memory_space<smem>>) -> (i32, i32, i32) {
    %c0_i32 = arith.constant 0 : i32
    %c0_i32_0 = arith.constant 0 : i32
    %c0_i32_1 = arith.constant 0 : i32
    return %arg0, %c0_i32, %c0_i32_0 : i32, i32, i32
  }
  func.func @transform_1(%arg0: i32, %arg1: memref<2xi32, #tpu.memory_space<smem>>) -> (i32, i32, i32) {
    %c0_i32 = arith.constant 0 : i32
    %c0_i32_0 = arith.constant 0 : i32
    %c0_i32_1 = arith.constant 0 : i32
    return %arg0, %c0_i32, %c0_i32_0 : i32, i32, i32
  }
  func.func @transform_2(%arg0: i32, %arg1: memref<2xi32, #tpu.memory_space<smem>>) -> (i32, i32, i32) {
    %c0_i32 = arith.constant 0 : i32
    %c0_i32_0 = arith.constant 0 : i32
    %c0_i32_1 = arith.constant 0 : i32
    return %arg0, %c0_i32, %c0_i32_0 : i32, i32, i32
  }
  func.func @transform_3(%arg0: i32, %arg1: memref<2xi32, #tpu.memory_space<smem>>) -> (i32, i32, i32) {
    %c0_i32 = arith.constant 0 : i32
    %c0_i32_0 = arith.constant 0 : i32
    %c0_i32_1 = arith.constant 0 : i32
    return %arg0, %c0_i32, %c0_i32_0 : i32, i32, i32
  }
  func.func @transform_4(%arg0: i32, %arg1: memref<2xi32, #tpu.memory_space<smem>>) -> (i32, i32, i32) {
    %c0_i32 = arith.constant 0 : i32
    %c0_i32_0 = arith.constant 0 : i32
    %c0_i32_1 = arith.constant 0 : i32
    return %arg0, %c0_i32, %c0_i32_0 : i32, i32, i32
  }
}

</mosaic_0001>

<llo_original>
// kernel: refine_multibox_loss.1
$region0: #{refine_multibox_loss.1}
  #allocation0 [shape = 'u32[]', space=smem, size = 0x4, offset = 0x4, fixed_abs, tag = 'smem constant byte address 0x4 - core index']
  #allocation1 [shape = 'u32[144,128]{1,0:T(1,128)}', space=vmem, size = 0x12000, scoped, tag = 'internal scratch']
  #allocation2 [shape = 's32[1]{0}', space=sflag, size = 0x4, scoped, tag = 'scoped memory for refine_multibox_loss.1']
  #allocation3 [shape = 'u8[512]{0}', space=smem, size = 0x200, scoped, tag = 'prefetched SMEM operand 0']
  %s0 = inlined_call_operand.vmem [shape: s32[2], index: 0, kind: input, shape index: {}]
  %s1 = inlined_call_operand.vmem [shape: f32[2,8,128], index: 1, kind: input, shape index: {}]
  %s2 = inlined_call_operand.vmem [shape: f32[2,4,128], index: 2, kind: input, shape index: {}]
  %s3 = inlined_call_operand.vmem [shape: s32[2,1,128], index: 3, kind: input, shape index: {}]
  %s4 = inlined_call_operand.vmem [shape: f32[2,4,128], index: 4, kind: input, shape index: {}]
  %s5 = inlined_call_operand.vmem [shape: f32[1,1,256], index: 5, kind: output, shape index: {}]
  %s6 = sld [smem:[#allocation0]]
  $region33: #{refine_multibox_loss.1} parent=0
    _
  %s8 = ssub.s32 1, %s6
  %s9 = scalar_select 0, %s8, %s6
  %s10 = sshll.u32 %s0, 4
  %s11 = int_to_ptr.vmem [resolvable:$true] %s10
  %13 = dma.vmem_to_smem %s11, 16, [#allocation3], [#allocation2]
  %14 = dma.done [#allocation2], 16
  %15 = sfence
  // Predicated region
  $region2: #{refine_multibox_loss.1} parent=0 // pred_check
    _
  $region3: #{refine_multibox_loss.1} parent=0 // pred_check_branch
    %17 = sbr.rel (0) target = $region5
  $region4: #{refine_multibox_loss.1} parent=0 // pred_region
    _
  $region5: #{refine_multibox_loss.1} parent=0 // pred_fallthru
    _
  // Predicated region
  $region6: #{refine_multibox_loss.1} parent=0 // pred_check
    _
  $region7: #{refine_multibox_loss.1} parent=0 // pred_check_branch
    %19 = sbr.rel (0) target = $region9
  $region8: #{refine_multibox_loss.1} parent=0 // pred_region
    _
  $region9: #{refine_multibox_loss.1} parent=0 // pred_fallthru
    _
  // Predicated region
  $region10: #{refine_multibox_loss.1} parent=0 // pred_check
    _
  $region11: #{refine_multibox_loss.1} parent=0 // pred_check_branch
    %21 = sbr.rel (0) target = $region13
  $region12: #{refine_multibox_loss.1} parent=0 // pred_region
    _
  $region13: #{refine_multibox_loss.1} parent=0 // pred_fallthru
    _
  // Predicated region
  $region14: #{refine_multibox_loss.1} parent=0 // pred_check
    _
  $region15: #{refine_multibox_loss.1} parent=0 // pred_check_branch
    %23 = sbr.rel (0) target = $region17
  $region16: #{refine_multibox_loss.1} parent=0 // pred_region
    _
  $region17: #{refine_multibox_loss.1} parent=0 // pred_fallthru
    _
  %s26 = smul.u32 0, 2
  %v27 = vlaneseq
  %v28 = vshrl.u32 %v27, 7
  %v29 = vadd.s32 %v28, 8
  %v30 = vadd.s32 %v28, 16
  %v31 = vadd.s32 %v28, 24
  %v32 = vadd.s32 %v28, 32
  %v33 = vadd.s32 %v28, 40
  %v34 = vadd.s32 %v28, 48
  %v35 = vadd.s32 %v28, 56
  %v36 = vadd.s32 %v28, 64
  %v37 = vadd.s32 %v28, 72
  %v38 = vadd.s32 %v28, 80
  %v39 = vadd.s32 %v28, 88
  %v40 = vadd.s32 %v28, 96
  %v41 = vadd.s32 %v28, 104
  %v42 = vadd.s32 %v28, 112
  %v43 = vadd.s32 %v28, 120
  %v44 = vlaneseq
  %v45 = vand.u32 %v44, 127
  %vm46 = vcmp.lt.s32.totalorder %v28, %v45
  %vm47 = vcmp.lt.s32.totalorder %v29, %v45
  %vm48 = vcmp.lt.s32.totalorder %v30, %v45
  %vm49 = vcmp.lt.s32.totalorder %v31, %v45
  %vm50 = vcmp.lt.s32.totalorder %v32, %v45
  %vm51 = vcmp.lt.s32.totalorder %v33, %v45
  %vm52 = vcmp.lt.s32.totalorder %v34, %v45
  %vm53 = vcmp.lt.s32.totalorder %v35, %v45
  %vm54 = vcmp.lt.s32.totalorder %v36, %v45
  %vm55 = vcmp.lt.s32.totalorder %v37, %v45
  %vm56 = vcmp.lt.s32.totalorder %v38, %v45
  %vm57 = vcmp.lt.s32.totalorder %v39, %v45
  %vm58 = vcmp.lt.s32.totalorder %v40, %v45
  %vm59 = vcmp.lt.s32.totalorder %v41, %v45
  %vm60 = vcmp.lt.s32.totalorder %v42, %v45
  %vm61 = vcmp.lt.s32.totalorder %v43, %v45
  loop: start=0, step=1, limit=2
  $region18: #{refine_multibox_loss.1} parent=0 // loop_pre_header
    _
  $region19: #{refine_multibox_loss.1} parent=0 // loop_header
    %s63 = sphi 0, %s67
    %p64 = scmp.ge.s32.totalorder %s63, 2
    %v68 = vphi 0.0, %v401
    %v69 = vphi 0.0, %v399
  $region20: #{refine_multibox_loss.1} parent=0 // loop_header_branch
    %66 = sbr.rel (%p64) target = $region24
  $region21: #{refine_multibox_loss.1} parent=0 // loop_body
    %s70 = smul.u32 %s63, 8
    %s71 = scalar_lea.vmem %s1, %s70
    %v72 = vld [vmem:[%s71] sm:$0xff]
    %s73 = smul.u32 %s63, 4
    %s74 = scalar_lea.vmem %s2, %s73
    %v75 = vld [vmem:[%s74] sm:$0xf]
    %s76 = scalar_lea.vmem %s3, %s63
    %v77 = vld [vmem:[%s76] sm:$0x1]
    %s78 = scalar_lea.vmem %s4, %s73
    %v79 = vld [vmem:[%s78] sm:$0xf]
    %v80 = vrot.slane %v72, 4
    %v81 = vmax.f32 %v72, %v80
    %v82 = vrot.slane %v81, 2
    %v83 = vmax.f32 %v81, %v82
    %v84 = vrot.slane %v83, 1
    %v85 = vmax.f32 %v83, %v84
    %v86 = vsub.f32 %v72, %v85
    %v87 = vmul.f32 %v86, 1.442695
    %v88 = vpow.pop %v87
    %v89 = vrot.slane %v88, 4
    %v90 = vadd.f32 %v88, %v89
    %v91 = vrot.slane %v90, 2
    %v92 = vadd.f32 %v90, %v91
    %v93 = vrot.slane %v92, 1
    %v94 = vadd.f32 %v92, %v93
    %v95 = vlog2.pop %v94
    %v96 = vmul.f32 %v95, 0.6931472
    %v97 = vadd.f32 %v96, %v85
    %v98 = vlaneseq
    %v99 = vshrl.u32 %v98, 7
    %v100 = vsub.s32 0, %v99
    %v101 = vrot.slane %v77, %v100
    %vm102 = vcmp.eq.s32.totalorder %v28, %v101
    %v103 = vsel %vm102, %v72, 0.0
    %v104 = vrot.slane %v103, 4
    %v105 = vadd.f32 %v103, %v104
    %v106 = vrot.slane %v105, 2
    %v107 = vadd.f32 %v105, %v106
    %v108 = vrot.slane %v107, 1
    %v109 = vadd.f32 %v107, %v108
    %v110 = vsub.f32 %v97, %v109
    %vm111 = vcmp.gt.s32.totalorder %v77, 0
    %v112 = vsel %vm111, 1, 0
    %v113 = vcvt.s32.f32 %v112
    %v114 = vsel %vm111, 0.0, %v110
    %v115 = vsub.f32 %v75, %v79
    %v116 = vand.u32 2147483647, %v115
    %vm117 = vcmp.lt.f32.partialorder %v116, 1.0
    %v118 = vmul.f32 %v115, 0.5
    %v119 = vmul.f32 %v118, %v115
    %v120 = vsub.f32 %v116, 0.5
    %v121 = vsel %vm117, %v119, %v120
    %vm122 = vcmask 1043456
    %v123 = vsel %vm122, %v121, 0.0
    %v124 = vrot.slane %v123, 4
    %v125 = vadd.f32 %v123, %v124
    %v126 = vrot.slane %v125, 2
    %v127 = vadd.f32 %v125, %v126
    %v128 = vrot.slane %v127, 1
    %v129 = vadd.f32 %v127, %v128
    %130 = vxpose.xlu0.b32.start [1/16] %v114, 128
    %131 = vxpose.xlu0.b32.cont [2/16] 0.0, 128
    %132 = vxpose.xlu0.b32.cont [3/16] 0.0, 128
    %133 = vxpose.xlu0.b32.cont [4/16] 0.0, 128
    %134 = vxpose.xlu0.b32.cont [5/16] 0.0, 128
    %135 = vxpose.xlu0.b32.cont [6/16] 0.0, 128
    %136 = vxpose.xlu0.b32.cont [7/16] 0.0, 128
    %137 = vxpose.xlu0.b32.cont [8/16] 0.0, 128
    %138 = vxpose.xlu0.b32.cont [9/16] 0.0, 128
    %139 = vxpose.xlu0.b32.cont [10/16] 0.0, 128
    %140 = vxpose.xlu0.b32.cont [11/16] 0.0, 128
    %141 = vxpose.xlu0.b32.cont [12/16] 0.0, 128
    %142 = vxpose.xlu0.b32.cont [13/16] 0.0, 128
    %143 = vxpose.xlu0.b32.cont [14/16] 0.0, 128
    %144 = vxpose.xlu0.b32.cont [15/16] 0.0, 128
    %145 = vxpose.xlu0.b32.end [16/16] 0.0, 128
    %v146 = vpop.trf.xlu0
    %v147 = vpop.trf.xlu0
    %v148 = vpop.trf.xlu0
    %v149 = vpop.trf.xlu0
    %v150 = vpop.trf.xlu0
    %v151 = vpop.trf.xlu0
    %v152 = vpop.trf.xlu0
    %v153 = vpop.trf.xlu0
    %v154 = vpop.trf.xlu0
    %v155 = vpop.trf.xlu0
    %v156 = vpop.trf.xlu0
    %v157 = vpop.trf.xlu0
    %v158 = vpop.trf.xlu0
    %v159 = vpop.trf.xlu0
    %v160 = vpop.trf.xlu0
    %v161 = vpop.trf.xlu0
    %163 = vset.pattern.permute.xlu0 0
    %164 = vperm.xlu0 %163, %v146
    %v165 = vpop.permute.xlu0 %164
    %168 = vset.pattern.permute.xlu0 0
    %169 = vperm.xlu0 %168, %v147
    %v170 = vpop.permute.xlu0 %169
    %173 = vset.pattern.permute.xlu0 0
    %174 = vperm.xlu0 %173, %v148
    %v175 = vpop.permute.xlu0 %174
    %178 = vset.pattern.permute.xlu0 0
    %179 = vperm.xlu0 %178, %v149
    %v180 = vpop.permute.xlu0 %179
    %183 = vset.pattern.permute.xlu0 0
    %184 = vperm.xlu0 %183, %v150
    %v185 = vpop.permute.xlu0 %184
    %188 = vset.pattern.permute.xlu0 0
    %189 = vperm.xlu0 %188, %v151
    %v190 = vpop.permute.xlu0 %189
    %193 = vset.pattern.permute.xlu0 0
    %194 = vperm.xlu0 %193, %v152
    %v195 = vpop.permute.xlu0 %194
    %198 = vset.pattern.permute.xlu0 0
    %199 = vperm.xlu0 %198, %v153
    %v200 = vpop.permute.xlu0 %199
    %203 = vset.pattern.permute.xlu0 0
    %204 = vperm.xlu0 %203, %v154
    %v205 = vpop.permute.xlu0 %204
    %208 = vset.pattern.permute.xlu0 0
    %209 = vperm.xlu0 %208, %v155
    %v210 = vpop.permute.xlu0 %209
    %213 = vset.pattern.permute.xlu0 0
    %214 = vperm.xlu0 %213, %v156
    %v215 = vpop.permute.xlu0 %214
    %218 = vset.pattern.permute.xlu0 0
    %219 = vperm.xlu0 %218, %v157
    %v220 = vpop.permute.xlu0 %219
    %223 = vset.pattern.permute.xlu0 0
    %224 = vperm.xlu0 %223, %v158
    %v225 = vpop.permute.xlu0 %224
    %228 = vset.pattern.permute.xlu0 0
    %229 = vperm.xlu0 %228, %v159
    %v230 = vpop.permute.xlu0 %229
    %233 = vset.pattern.permute.xlu0 0
    %234 = vperm.xlu0 %233, %v160
    %v235 = vpop.permute.xlu0 %234
    %238 = vset.pattern.permute.xlu0 0
    %239 = vperm.xlu0 %238, %v161
    %v240 = vpop.permute.xlu0 %239
    %v243 = vlaneseq
    %v244 = vshrl.u32 %v243, 7
    %v245 = vsub.s32 0, %v244
    %v246 = vrot.slane %v114, %v245
    %vm248 = vcmp.gt.f32.partialorder %v165, %v246
    %vm249 = vcmp.gt.f32.partialorder %v170, %v246
    %vm250 = vcmp.gt.f32.partialorder %v175, %v246
    %vm251 = vcmp.gt.f32.partialorder %v180, %v246
    %vm252 = vcmp.gt.f32.partialorder %v185, %v246
    %vm253 = vcmp.gt.f32.partialorder %v190, %v246
    %vm254 = vcmp.gt.f32.partialorder %v195, %v246
    %vm255 = vcmp.gt.f32.partialorder %v200, %v246
    %vm256 = vcmp.gt.f32.partialorder %v205, %v246
    %vm257 = vcmp.gt.f32.partialorder %v210, %v246
    %vm258 = vcmp.gt.f32.partialorder %v215, %v246
    %vm259 = vcmp.gt.f32.partialorder %v220, %v246
    %vm260 = vcmp.gt.f32.partialorder %v225, %v246
    %vm261 = vcmp.gt.f32.partialorder %v230, %v246
    %vm262 = vcmp.gt.f32.partialorder %v235, %v246
    %vm263 = vcmp.gt.f32.partialorder %v240, %v246
    %vm264 = vcmp.eq.f32.partialorder %v165, %v246
    %vm265 = vcmp.eq.f32.partialorder %v170, %v246
    %vm266 = vcmp.eq.f32.partialorder %v175, %v246
    %vm267 = vcmp.eq.f32.partialorder %v180, %v246
    %vm268 = vcmp.eq.f32.partialorder %v185, %v246
    %vm269 = vcmp.eq.f32.partialorder %v190, %v246
    %vm270 = vcmp.eq.f32.partialorder %v195, %v246
    %vm271 = vcmp.eq.f32.partialorder %v200, %v246
    %vm272 = vcmp.eq.f32.partialorder %v205, %v246
    %vm273 = vcmp.eq.f32.partialorder %v210, %v246
    %vm274 = vcmp.eq.f32.partialorder %v215, %v246
    %vm275 = vcmp.eq.f32.partialorder %v220, %v246
    %vm276 = vcmp.eq.f32.partialorder %v225, %v246
    %vm277 = vcmp.eq.f32.partialorder %v230, %v246
    %vm278 = vcmp.eq.f32.partialorder %v235, %v246
    %vm279 = vcmp.eq.f32.partialorder %v240, %v246
    %vm280 = vmand %vm264, %vm46
    %vm281 = vmand %vm265, %vm47
    %vm282 = vmand %vm266, %vm48
    %vm283 = vmand %vm267, %vm49
    %vm284 = vmand %vm268, %vm50
    %vm285 = vmand %vm269, %vm51
    %vm286 = vmand %vm270, %vm52
    %vm287 = vmand %vm271, %vm53
    %vm288 = vmand %vm272, %vm54
    %vm289 = vmand %vm273, %vm55
    %vm290 = vmand %vm274, %vm56
    %vm291 = vmand %vm275, %vm57
    %vm292 = vmand %vm276, %vm58
    %vm293 = vmand %vm277, %vm59
    %vm294 = vmand %vm278, %vm60
    %vm295 = vmand %vm279, %vm61
    %vm296 = vmor %vm248, %vm280
    %vm297 = vmor %vm249, %vm281
    %vm298 = vmor %vm250, %vm282
    %vm299 = vmor %vm251, %vm283
    %vm300 = vmor %vm252, %vm284
    %vm301 = vmor %vm253, %vm285
    %vm302 = vmor %vm254, %vm286
    %vm303 = vmor %vm255, %vm287
    %vm304 = vmor %vm256, %vm288
    %vm305 = vmor %vm257, %vm289
    %vm306 = vmor %vm258, %vm290
    %vm307 = vmor %vm259, %vm291
    %vm308 = vmor %vm260, %vm292
    %vm309 = vmor %vm261, %vm293
    %vm310 = vmor %vm262, %vm294
    %vm311 = vmor %vm263, %vm295
    %v312 = vsel %vm296, 1, 0
    %v313 = vsel %vm297, 1, 0
    %v314 = vsel %vm298, 1, 0
    %v315 = vsel %vm299, 1, 0
    %v316 = vsel %vm300, 1, 0
    %v317 = vsel %vm301, 1, 0
    %v318 = vsel %vm302, 1, 0
    %v319 = vsel %vm303, 1, 0
    %v320 = vsel %vm304, 1, 0
    %v321 = vsel %vm305, 1, 0
    %v322 = vsel %vm306, 1, 0
    %v323 = vsel %vm307, 1, 0
    %v324 = vsel %vm308, 1, 0
    %v325 = vsel %vm309, 1, 0
    %v326 = vsel %vm310, 1, 0
    %v327 = vsel %vm311, 1, 0
    %v328 = vcvt.s32.f32 %v312
    %v329 = vcvt.s32.f32 %v313
    %v330 = vcvt.s32.f32 %v314
    %v331 = vcvt.s32.f32 %v315
    %v332 = vcvt.s32.f32 %v316
    %v333 = vcvt.s32.f32 %v317
    %v334 = vcvt.s32.f32 %v318
    %v335 = vcvt.s32.f32 %v319
    %v336 = vcvt.s32.f32 %v320
    %v337 = vcvt.s32.f32 %v321
    %v338 = vcvt.s32.f32 %v322
    %v339 = vcvt.s32.f32 %v323
    %v340 = vcvt.s32.f32 %v324
    %v341 = vcvt.s32.f32 %v325
    %v342 = vcvt.s32.f32 %v326
    %v343 = vcvt.s32.f32 %v327
    %v344 = vpack.c.bf16 %v329, %v328
    %v345 = vpack.c.bf16 %v331, %v330
    %v346 = vpack.c.bf16 %v333, %v332
    %v347 = vpack.c.bf16 %v335, %v334
    %v348 = vpack.c.bf16 %v337, %v336
    %v349 = vpack.c.bf16 %v339, %v338
    %v350 = vpack.c.bf16 %v341, %v340
    %v351 = vpack.c.bf16 %v343, %v342
    %352 = vmatprep.subr.bf16.mxu0 0
    %353 = vmatpush1.bf16.msra.mxu0 %v344
    %354 = vmatprep.subr.bf16.mxu0 0
    %355 = vmatpush1.bf16.msra.mxu0 %v345
    %356 = vmatprep.subr.bf16.mxu0 0
    %357 = vmatpush1.bf16.msra.mxu0 %v346
    %358 = vmatprep.subr.bf16.mxu0 0
    %359 = vmatpush1.bf16.msra.mxu0 %v347
    %360 = vmatprep.subr.bf16.mxu0 0
    %361 = vmatpush1.bf16.msra.mxu0 %v348
    %362 = vmatprep.subr.bf16.mxu0 0
    %363 = vmatpush1.bf16.msra.mxu0 %v349
    %364 = vmatprep.subr.bf16.mxu0 0
    %365 = vmatpush1.bf16.msra.mxu0 %v350
    %366 = vmatprep.subr.bf16.mxu0 0
    %367 = vmatpush1.bf16.msra.mxu0 %v351
    %368 = vmatprep.subr.bf16.mxu0 0
    %369 = vmatpush1.bf16.msra.mxu0 0
    %370 = vmatprep.subr.bf16.mxu0 0
    %371 = vmatpush1.bf16.msra.mxu0 0
    %372 = vmatprep.subr.bf16.mxu0 0
    %373 = vmatpush1.bf16.msra.mxu0 0
    %374 = vmatprep.subr.bf16.mxu0 0
    %375 = vmatpush1.bf16.msra.mxu0 0
    %376 = vmatprep.subr.bf16.mxu0 0
    %377 = vmatpush1.bf16.msra.mxu0 0
    %378 = vmatprep.subr.bf16.mxu0 0
    %379 = vmatpush1.bf16.msra.mxu0 0
    %380 = vmatprep.subr.bf16.mxu0 0
    %381 = vmatpush1.bf16.msra.mxu0 0
    %382 = vmatprep.subr.bf16.mxu0 0
    %383 = vmatpush1.bf16.msra.mxu0 0
    %384 = vmatprep.mubr.bf16.mxu0 0
    %385 = vmatmul.mubr.bf16.gmra.mrb[0].mxu0 1065369472
    %v386 = vpop.f32.mrb[0].mxu0
    %v387 = vadd.f32 0.0, %v386
    %v388 = vpop.f32.mrb[0].mxu0
    %v389 = vpop.f32.mrb[0].mxu0
    %v390 = vpop.f32.mrb[0].mxu0
    %391 = vdwg.mxu0
    %s392 = sadd.s32 %s26, %s63
    %s393 = sld [smem:[#allocation3 + %s392]]
    %s394 = scvt.s32.f32 %s393
    %v395 = vstv %s394
    %vm396 = vcmp.lt.f32.partialorder %v387, %v395
    %vm397 = vmor %vm111, %vm396
    %v398 = vsel %vm397, %v110, 0.0
    %v399 = vadd.f32 %v69, %v398
    %v400 = vmul.f32 %v129, %v113
    %v401 = vadd.f32 %v68, %v400
  $region22: #{refine_multibox_loss.1} parent=0 // loop_footer
    %s67 = sadd.s32 1, %s63
  $region23: #{refine_multibox_loss.1} parent=0 // loop_footer_branch
    %62 = sbr.rel target = $region19
  $region24: #{refine_multibox_loss.1} parent=0 // loop_exit
    _
  %v402 = vlaneseq
  %vm403 = vcmp.ge.s32.totalorder %v402, 0
  %vm404 = vcmp.lt.s32.totalorder %v402, 128
  %vm405 = vmand %vm403, %vm404
  %406 = vst.msk [vmem:[%s5] sm:$0x1] %vm405, %v68
  %407 = vst.msk [vmem:[%s5 + $0x1] sm:$0x1] %vm405, %v69
  // Predicated region
  $region25: #{refine_multibox_loss.1} parent=0 // pred_check
    _
  $region26: #{refine_multibox_loss.1} parent=0 // pred_check_branch
    %409 = sbr.rel (0) target = $region28
  $region27: #{refine_multibox_loss.1} parent=0 // pred_region
    _
  $region28: #{refine_multibox_loss.1} parent=0 // pred_fallthru
    _
  // Predicated region
  $region29: #{refine_multibox_loss.1} parent=0 // pred_check
    _
  $region30: #{refine_multibox_loss.1} parent=0 // pred_check_branch
    %411 = sbr.rel (0) target = $region32
  $region31: #{refine_multibox_loss.1} parent=0 // pred_region
    _
  $region32: #{refine_multibox_loss.1} parent=0 // pred_fallthru
    _

</llo_original>
